<compile_context>
chip_gen: v5e
topology: v5e:2x2
jax: 0.10.0
libtpu: 0.0.40
codegen_flags: <defaults>
</compile_context>

<pallas_src>
import functools

import jax
import jax.numpy as jnp
from jax.experimental import pallas as pl
from jax.experimental.pallas import tpu as pltpu

EPS = 1e-5
# Headroom below v7x's 64 MiB physical VMEM, well above v5e's 16 MiB scoped default.
_VMEM_LIMIT_BYTES = 48 * 1024 * 1024
# Target lane-tile size (sweepable); large tiles amortize the ~0.35us/step overhead.
_TARGET_LANES = 2048


# ----------------------------------------------------------------------------
# Kernel A: 1x1 conv (W @ x tile on the MXU) + ReLU, plus per-channel
#           sum / sum-of-squares accumulated per batch element.
# ----------------------------------------------------------------------------
def convrelu_stats_kernel(x_ref, w_ref, y_ref, sum_ref, sumsq_ref):
    j = pl.program_id(1)  # spatial-tile index (reduction axis for the stats)

    x = x_ref[0]                                   # (Cin, TL)
    w = w_ref[...]                                 # (Cout, Cin)
    y = jnp.dot(w, x, preferred_element_type=jnp.float32)   # (Cout, TL)
    y = jnp.maximum(y, 0.0)
    y_ref[0] = y.astype(y_ref.dtype)               # optionally bf16 to halve HBM traffic

    @pl.when(j == 0)
    def _():
        sum_ref[...] = jnp.zeros_like(sum_ref)
        sumsq_ref[...] = jnp.zeros_like(sumsq_ref)

    # Stats are taken from the full-precision f32 matmul result (before any
    # bf16 downcast of the stored intermediate).
    sum_ref[0] += jnp.sum(y, axis=-1, keepdims=True)        # (Cout, 1)
    sumsq_ref[0] += jnp.sum(y * y, axis=-1, keepdims=True)  # (Cout, 1)


# ----------------------------------------------------------------------------
# Kernel B: apply the folded batch-norm affine:  out = y * scale + shift
# ----------------------------------------------------------------------------
def bn_apply_kernel(y_ref, scale_ref, shift_ref, o_ref):
    y = y_ref[0].astype(jnp.float32)               # (Cout, TL)
    o_ref[0] = (y * scale_ref[...] + shift_ref[...]).astype(o_ref.dtype)


def _pick_lane_tile(hw, target):
    """Largest 128-multiple dividing hw that is <= target; hw itself if small."""
    if hw <= target:
        return hw
    best = 0
    t = 128
    while t <= target:
        if hw % t == 0:
            best = t
        t += 128
    # Fallback: take the whole spatial extent as one tile (block == full dim,
    # so the 128-lane divisibility constraint does not apply).
    return best if best > 0 else hw


@functools.partial(jax.jit, static_argnames=("intermediate_dtype", "target_lanes"))
def transition_layer(x_nchw, conv_w, gamma, beta, *,
                     intermediate_dtype=jnp.float32, target_lanes=_TARGET_LANES):
    """x_nchw: (N, Cin, H, W) f32; conv_w: (Cout, Cin); gamma/beta: (Cout,).

    intermediate_dtype=jnp.bfloat16 halves the HBM traffic of the y
    intermediate (the largest stream after x) at a small precision cost in the
    normalized output; f32 keeps exact PyTorch forward semantics.
    """
    N, Cin, H, W = x_nchw.shape
    Cout = conv_w.shape[0]
    HW = H * W
    M = N * HW

    tl = _pick_lane_tile(HW, target_lanes)
    num_tiles = HW // tl
    grid = (N, num_tiles)

    x3d = x_nchw.reshape(N, Cin, HW).astype(jnp.float32)   # no transpose needed
    w2d = conv_w.astype(jnp.float32)                        # (Cout, Cin)

    y3d, psum, psumsq = pl.pallas_call(
        convrelu_stats_kernel,
        out_shape=(
            jax.ShapeDtypeStruct((N, Cout, HW), intermediate_dtype),
            jax.ShapeDtypeStruct((N, Cout, 1), jnp.float32),
            jax.ShapeDtypeStruct((N, Cout, 1), jnp.float32),
        ),
        grid_spec=pltpu.PrefetchScalarGridSpec(
            num_scalar_prefetch=0,
            grid=grid,
            in_specs=[
                pl.BlockSpec((1, Cin, tl), lambda n, j: (n, 0, j)),
                pl.BlockSpec((Cout, Cin), lambda n, j: (0, 0)),
            ],
            out_specs=(
                pl.BlockSpec((1, Cout, tl), lambda n, j: (n, 0, j)),
                pl.BlockSpec((1, Cout, 1), lambda n, j: (n, 0, 0)),
                pl.BlockSpec((1, Cout, 1), lambda n, j: (n, 0, 0)),
            ),
        ),
        compiler_params=pltpu.CompilerParams(
            dimension_semantics=("parallel", "arbitrary"),
            vmem_limit_bytes=_VMEM_LIMIT_BYTES,
        ),
    )(x3d, w2d)

    # Tiny per-channel glue: fold BN into one scale/shift (stays on device).
    # TODO(synk): one-pass E[y^2]-E[y]^2 can cancel in f32 when a channel's
    # mean^2 >> var; switch to a shifted two-pass reduction if tolerances tighten.
    csum = jnp.sum(psum, axis=0)                     # (Cout, 1)
    csumsq = jnp.sum(psumsq, axis=0)                 # (Cout, 1)
    mean = csum / M
    var = csumsq / M - mean * mean                   # biased var (PyTorch training BN)
    inv_std = jax.lax.rsqrt(var + EPS)
    scale = gamma.reshape(Cout, 1).astype(jnp.float32) * inv_std    # (Cout, 1)
    shift = beta.reshape(Cout, 1).astype(jnp.float32) - mean * scale

    out_dtype = jnp.float32
    # Re-use the y buffer for the final output when dtypes match (drops one
    # (N, Cout, HW) HBM allocation).
    alias = {0: 0} if intermediate_dtype == out_dtype else {}

    out3d = pl.pallas_call(
        bn_apply_kernel,
        out_shape=jax.ShapeDtypeStruct((N, Cout, HW), out_dtype),
        grid_spec=pltpu.PrefetchScalarGridSpec(
            num_scalar_prefetch=0,
            grid=grid,
            in_specs=[
                pl.BlockSpec((1, Cout, tl), lambda n, j: (n, 0, j)),
                pl.BlockSpec((Cout, 1), lambda n, j: (0, 0)),
                pl.BlockSpec((Cout, 1), lambda n, j: (0, 0)),
            ],
            out_specs=pl.BlockSpec((1, Cout, tl), lambda n, j: (n, 0, j)),
        ),
        compiler_params=pltpu.CompilerParams(
            dimension_semantics=("parallel", "parallel"),
            vmem_limit_bytes=_VMEM_LIMIT_BYTES,
        ),
        input_output_aliases=alias,
    )(y3d, scale, shift)

    # (N, Cout, HW) is already NCHW order -> just reshape.
    return out3d.reshape(N, Cout, H, W)


def _reference(x_nchw, conv_w, gamma, beta):
    """Pure-JAX reference of the PyTorch forward (training-mode BN)."""
    y = jnp.einsum("nchw,oc->nohw", x_nchw, conv_w)       # 1x1 conv, no bias
    y = jnp.maximum(y, 0.0)
    mean = jnp.mean(y, axis=(0, 2, 3), keepdims=True)
    var = jnp.mean((y - mean) ** 2, axis=(0, 2, 3), keepdims=True)
    yhat = (y - mean) * jax.lax.rsqrt(var + EPS)
    return yhat * gamma.reshape(1, -1, 1, 1) + beta.reshape(1, -1, 1, 1)


if __name__ == "__main__":
    key = jax.random.PRNGKey(0)
    kx, kw = jax.random.split(key)

    N, Cin, H, W = 2, 4, 16, 16
    Cout = 8

    x = jax.random.normal(kx, (N, Cin, H, W), dtype=jnp.float32)
    conv_w = jax.random.normal(kw, (Cout, Cin), dtype=jnp.float32) * 0.1
    gamma = jnp.ones((Cout,), dtype=jnp.float32)   # PyTorch BN default init
    beta = jnp.zeros((Cout,), dtype=jnp.float32)

    ref = _reference(x, conv_w, gamma, beta)

    # Exact-semantics path (f32 intermediate, aliased output buffer).
    out = transition_layer(x, conv_w, gamma, beta)
    out = jax.block_until_ready(out)
    assert out.shape == (N, Cout, H, W)
    assert jnp.allclose(out, ref, atol=1e-4, rtol=1e-4), "f32 path mismatch vs reference"

    # Bandwidth-optimized path (bf16 intermediate) -- looser tolerance by design.
    out_bf = transition_layer(x, conv_w, gamma, beta, intermediate_dtype=jnp.bfloat16)
    out_bf = jax.block_until_ready(out_bf)
    assert out_bf.shape == (N, Cout, H, W)
    assert jnp.allclose(out_bf, ref, atol=5e-2, rtol=5e-2), "bf16 path mismatch vs reference"

    print("KERNEL_OK")
</pallas_src>

<mosaic_0001>
module attributes {stable_mosaic.version = 11 : i64} {
  func.func @convrelu_stats_kernel(%arg0: i32, %arg1: i32, %arg2: memref<1x4x256xf32, #tpu.memory_space<vmem>>, %arg3: memref<8x4xf32, #tpu.memory_space<vmem>>, %arg4: memref<1x8x256xf32, #tpu.memory_space<vmem>>, %arg5: memref<1x8x1xf32, #tpu.memory_space<vmem>>, %arg6: memref<1x8x1xf32, #tpu.memory_space<vmem>>) attributes {dimension_semantics = [#tpu.dimension_semantics<parallel>, #tpu.dimension_semantics<arbitrary>], iteration_bounds = array<i64: 2, 1>, scalar_prefetch = 0 : i64, scratch_operands = 0 : i64, tpu.core_type = #tpu.core_type<tc>, window_params = [{transform_indices = @transform_0, window_bounds = array<i64: 1, 4, 256>}, {pipeline_mode = #tpu.pipeline_mode<synchronous>, transform_indices = @transform_1, window_bounds = array<i64: 8, 4>}, {transform_indices = @transform_2, window_bounds = array<i64: 1, 8, 256>}, {transform_indices = @transform_3, window_bounds = array<i64: 1, 8, 1>}, {transform_indices = @transform_4, window_bounds = array<i64: 1, 8, 1>}]} {
    %c0 = arith.constant 0 : index
    %c0_0 = arith.constant 0 : index
    %c0_1 = arith.constant 0 : index
    %0 = vector.load %arg2[%c0, %c0_0, %c0_1] : memref<1x4x256xf32, #tpu.memory_space<vmem>>, vector<1x4x256xf32>
    %1 = vector.shape_cast %0 : vector<1x4x256xf32> to vector<4x256xf32>
    %c0_2 = arith.constant 0 : index
    %c0_3 = arith.constant 0 : index
    %2 = vector.load %arg3[%c0_2, %c0_3] : memref<8x4xf32, #tpu.memory_space<vmem>>, vector<8x4xf32>
    %cst = arith.constant dense<0.000000e+00> : vector<8x256xf32>
    %3 = tpu.matmul %2, %1, %cst {dimension_numbers = #tpu.dot_dimension_numbers<[1], [0], [0], [1], [0, 0, 1, 1], [], []>} : vector<8x4xf32>, vector<4x256xf32>, vector<8x256xf32> -> vector<8x256xf32>
    %cst_4 = arith.constant 0.000000e+00 : f32
    %4 = vector.broadcast %cst_4 : f32 to vector<8x256xf32>
    %5 = arith.maximumf %3, %4 : vector<8x256xf32>
    %c0_5 = arith.constant 0 : index
    %c0_6 = arith.constant 0 : index
    %c0_7 = arith.constant 0 : index
    %6 = vector.load %arg4[%c0_5, %c0_6, %c0_7] : memref<1x8x256xf32, #tpu.memory_space<vmem>>, vector<1x8x256xf32>
    %7 = vector.shape_cast %6 : vector<1x8x256xf32> to vector<8x256xf32>
    %8 = vector.shape_cast %5 : vector<8x256xf32> to vector<1x8x256xf32>
    tpu.vector_store %arg4[%c0_5, %c0_6, %c0_7], %8 {strides = array<i32>} : memref<1x8x256xf32, #tpu.memory_space<vmem>>, vector<1x8x256xf32>,
    %c0_i32 = arith.constant 0 : i32
    %9 = arith.cmpi eq, %arg1, %c0_i32 : i32
    %10 = arith.extui %9 : i1 to i32
    %c0_i32_8 = arith.constant 0 : i32
    %11 = arith.cmpi ne, %10, %c0_i32_8 : i32
    scf.if %11 {
      %cst_23 = arith.constant 0.000000e+00 : f32
      %29 = vector.broadcast %cst_23 : f32 to vector<1x8x1xf32>
      %c0_24 = arith.constant 0 : index
      %c0_25 = arith.constant 0 : index
      %c0_26 = arith.constant 0 : index
      %30 = vector.load %arg5[%c0_24, %c0_25, %c0_26] : memref<1x8x1xf32, #tpu.memory_space<vmem>>, vector<1x8x1xf32>
      tpu.vector_store %arg5[%c0_24, %c0_25, %c0_26], %29 {strides = array<i32>} : memref<1x8x1xf32, #tpu.memory_space<vmem>>, vector<1x8x1xf32>,
      %cst_27 = arith.constant 0.000000e+00 : f32
      %31 = vector.broadcast %cst_27 : f32 to vector<1x8x1xf32>
      %c0_28 = arith.constant 0 : index
      %c0_29 = arith.constant 0 : index
      %c0_30 = arith.constant 0 : index
      %32 = vector.load %arg6[%c0_28, %c0_29, %c0_30] : memref<1x8x1xf32, #tpu.memory_space<vmem>>, vector<1x8x1xf32>
      tpu.vector_store %arg6[%c0_28, %c0_29, %c0_30], %31 {strides = array<i32>} : memref<1x8x1xf32, #tpu.memory_space<vmem>>, vector<1x8x1xf32>,
    } else {
    }
    %c0_9 = arith.constant 0 : index
    %c0_10 = arith.constant 0 : index
    %c0_11 = arith.constant 0 : index
    %12 = vector.load %arg5[%c0_9, %c0_10, %c0_11] : memref<1x8x1xf32, #tpu.memory_space<vmem>>, vector<1x8x1xf32>
    %13 = vector.shape_cast %12 : vector<1x8x1xf32> to vector<8x1xf32>
    %cst_12 = arith.constant dense<0.000000e+00> : vector<8xf32>
    %14 = vector.multi_reduction <add>, %5, %cst_12 [1] : vector<8x256xf32> to vector<8xf32>
    %15 = vector.shape_cast %14 : vector<8xf32> to vector<8x1xf32>
    %16 = arith.addf %13, %15 : vector<8x1xf32>
    %c0_13 = arith.constant 0 : index
    %c0_14 = arith.constant 0 : index
    %c0_15 = arith.constant 0 : index
    %17 = vector.load %arg5[%c0_13, %c0_14, %c0_15] : memref<1x8x1xf32, #tpu.memory_space<vmem>>, vector<1x8x1xf32>
    %18 = vector.shape_cast %17 : vector<1x8x1xf32> to vector<8x1xf32>
    %19 = vector.shape_cast %16 : vector<8x1xf32> to vector<1x8x1xf32>
    tpu.vector_store %arg5[%c0_13, %c0_14, %c0_15], %19 {strides = array<i32>} : memref<1x8x1xf32, #tpu.memory_space<vmem>>, vector<1x8x1xf32>,
    %c0_16 = arith.constant 0 : index
    %c0_17 = arith.constant 0 : index
    %c0_18 = arith.constant 0 : index
    %20 = vector.load %arg6[%c0_16, %c0_17, %c0_18] : memref<1x8x1xf32, #tpu.memory_space<vmem>>, vector<1x8x1xf32>
    %21 = vector.shape_cast %20 : vector<1x8x1xf32> to vector<8x1xf32>
    %22 = arith.mulf %5, %5 : vector<8x256xf32>
    %cst_19 = arith.constant dense<0.000000e+00> : vector<8xf32>
    %23 = vector.multi_reduction <add>, %22, %cst_19 [1] : vector<8x256xf32> to vector<8xf32>
    %24 = vector.shape_cast %23 : vector<8xf32> to vector<8x1xf32>
    %25 = arith.addf %21, %24 : vector<8x1xf32>
    %c0_20 = arith.constant 0 : index
    %c0_21 = arith.constant 0 : index
    %c0_22 = arith.constant 0 : index
    %26 = vector.load %arg6[%c0_20, %c0_21, %c0_22] : memref<1x8x1xf32, #tpu.memory_space<vmem>>, vector<1x8x1xf32>
    %27 = vector.shape_cast %26 : vector<1x8x1xf32> to vector<8x1xf32>
    %28 = vector.shape_cast %25 : vector<8x1xf32> to vector<1x8x1xf32>
    tpu.vector_store %arg6[%c0_20, %c0_21, %c0_22], %28 {strides = array<i32>} : memref<1x8x1xf32, #tpu.memory_space<vmem>>, vector<1x8x1xf32>,
    return
  }
  func.func @transform_0(%arg0: i32, %arg1: i32) -> (i32, i32, i32) {
    %c0_i32 = arith.constant 0 : i32
    %c0_i32_0 = arith.constant 0 : i32
    return %arg0, %c0_i32, %arg1 : i32, i32, i32
  }
  func.func @transform_1(%arg0: i32, %arg1: i32) -> (i32, i32) {
    %c0_i32 = arith.constant 0 : i32
    %c0_i32_0 = arith.constant 0 : i32
    %c0_i32_1 = arith.constant 0 : i32
    return %c0_i32, %c0_i32_0 : i32, i32
  }
  func.func @transform_2(%arg0: i32, %arg1: i32) -> (i32, i32, i32) {
    %c0_i32 = arith.constant 0 : i32
    %c0_i32_0 = arith.constant 0 : i32
    return %arg0, %c0_i32, %arg1 : i32, i32, i32
  }
  func.func @transform_3(%arg0: i32, %arg1: i32) -> (i32, i32, i32) {
    %c0_i32 = arith.constant 0 : i32
    %c0_i32_0 = arith.constant 0 : i32
    %c0_i32_1 = arith.constant 0 : i32
    return %arg0, %c0_i32, %c0_i32_0 : i32, i32, i32
  }
  func.func @transform_4(%arg0: i32, %arg1: i32) -> (i32, i32, i32) {
    %c0_i32 = arith.constant 0 : i32
    %c0_i32_0 = arith.constant 0 : i32
    %c0_i32_1 = arith.constant 0 : i32
    return %arg0, %c0_i32, %c0_i32_0 : i32, i32, i32
  }
}

module attributes {stable_mosaic.version = 11 : i64} {
  func.func @bn_apply_kernel(%arg0: i32, %arg1: i32, %arg2: memref<1x8x256xf32, #tpu.memory_space<vmem>>, %arg3: memref<8x1xf32, #tpu.memory_space<vmem>>, %arg4: memref<8x1xf32, #tpu.memory_space<vmem>>, %arg5: memref<1x8x256xf32, #tpu.memory_space<vmem>>) attributes {dimension_semantics = [#tpu.dimension_semantics<parallel>, #tpu.dimension_semantics<parallel>], iteration_bounds = array<i64: 2, 1>, scalar_prefetch = 0 : i64, scratch_operands = 0 : i64, tpu.core_type = #tpu.core_type<tc>, window_params = [{transform_indices = @transform_0, window_bounds = array<i64: 1, 8, 256>}, {pipeline_mode = #tpu.pipeline_mode<synchronous>, transform_indices = @transform_1, window_bounds = array<i64: 8, 1>}, {pipeline_mode = #tpu.pipeline_mode<synchronous>, transform_indices = @transform_2, window_bounds = array<i64: 8, 1>}, {transform_indices = @transform_3, window_bounds = array<i64: 1, 8, 256>}]} {
    %c0 = arith.constant 0 : index
    %c0_0 = arith.constant 0 : index
    %c0_1 = arith.constant 0 : index
    %0 = vector.load %arg2[%c0, %c0_0, %c0_1] : memref<1x8x256xf32, #tpu.memory_space<vmem>>, vector<1x8x256xf32>
    %1 = vector.shape_cast %0 : vector<1x8x256xf32> to vector<8x256xf32>
    %c0_2 = arith.constant 0 : index
    %c0_3 = arith.constant 0 : index
    %2 = vector.load %arg3[%c0_2, %c0_3] : memref<8x1xf32, #tpu.memory_space<vmem>>, vector<8x1xf32>
    %3 = vector.broadcast %2 : vector<8x1xf32> to vector<8x256xf32>
    %4 = arith.mulf %1, %3 : vector<8x256xf32>
    %c0_4 = arith.constant 0 : index
    %c0_5 = arith.constant 0 : index
    %5 = vector.load %arg4[%c0_4, %c0_5] : memref<8x1xf32, #tpu.memory_space<vmem>>, vector<8x1xf32>
    %6 = vector.broadcast %5 : vector<8x1xf32> to vector<8x256xf32>
    %7 = arith.addf %4, %6 : vector<8x256xf32>
    %c0_6 = arith.constant 0 : index
    %c0_7 = arith.constant 0 : index
    %c0_8 = arith.constant 0 : index
    %8 = vector.load %arg5[%c0_6, %c0_7, %c0_8] : memref<1x8x256xf32, #tpu.memory_space<vmem>>, vector<1x8x256xf32>
    %9 = vector.shape_cast %8 : vector<1x8x256xf32> to vector<8x256xf32>
    %10 = vector.shape_cast %7 : vector<8x256xf32> to vector<1x8x256xf32>
    tpu.vector_store %arg5[%c0_6, %c0_7, %c0_8], %10 {strides = array<i32>} : memref<1x8x256xf32, #tpu.memory_space<vmem>>, vector<1x8x256xf32>,
    return
  }
  func.func @transform_0(%arg0: i32, %arg1: i32) -> (i32, i32, i32) {
    %c0_i32 = arith.constant 0 : i32
    %c0_i32_0 = arith.constant 0 : i32
    return %arg0, %c0_i32, %arg1 : i32, i32, i32
  }
  func.func @transform_1(%arg0: i32, %arg1: i32) -> (i32, i32) {
    %c0_i32 = arith.constant 0 : i32
    %c0_i32_0 = arith.constant 0 : i32
    %c0_i32_1 = arith.constant 0 : i32
    return %c0_i32, %c0_i32_0 : i32, i32
  }
  func.func @transform_2(%arg0: i32, %arg1: i32) -> (i32, i32) {
    %c0_i32 = arith.constant 0 : i32
    %c0_i32_0 = arith.constant 0 : i32
    %c0_i32_1 = arith.constant 0 : i32
    return %c0_i32, %c0_i32_0 : i32, i32
  }
  func.func @transform_3(%arg0: i32, %arg1: i32) -> (i32, i32, i32) {
    %c0_i32 = arith.constant 0 : i32
    %c0_i32_0 = arith.constant 0 : i32
    return %arg0, %c0_i32, %arg1 : i32, i32, i32
  }
}

</mosaic_0001>

<llo_original>
// kernel: transition_layer.3
$region0: #{transition_layer.3}
  #allocation0 [shape = 'u32[]', space=smem, size = 0x4, offset = 0x4, fixed_abs, tag = 'smem constant byte address 0x4 - core index']
  #allocation1 [shape = 'u32[72,128]{1,0:T(1,128)}', space=vmem, size = 0x9000, scoped, tag = 'internal scratch']
  %s0 = inlined_call_operand.vmem [shape: f32[2,8,256], index: 0, kind: input, shape index: {}, may-alias: {0,3}]
  %s1 = inlined_call_operand.vmem [shape: f32[8,1], index: 1, kind: input, shape index: {}]
  %s2 = inlined_call_operand.vmem [shape: f32[8,1], index: 2, kind: input, shape index: {}]
  %s3 = inlined_call_operand.vmem [shape: f32[2,8,256], index: 3, kind: output, shape index: {}, may-alias: {0,3}]
  %s4 = sld [smem:[#allocation0]]
  $region45: #{transition_layer.3} parent=0
    _
  %s6 = ssub.s32 1, %s4
  %s7 = scalar_select 0, %s6, %s4
  loop: start=0, step=1, limit=4
  $region2: #{transition_layer.3} parent=0 // loop_pre_header
    _
  $region3: #{transition_layer.3} parent=0 // loop_header
    %s9 = sphi 0, %s13
    %p10 = scmp.ge.s32.totalorder %s9, 4
    %s16 = sphi 0, %s28
    %s17 = sphi 0, %s24
    %s18 = sphi 0, %s16
    %s19 = sphi 0, %s17
    %s20 = sphi 0, %s18
    %s21 = sphi 0, %s19
    %s33 = sphi 0, %s35
    %s36 = sphi 0, %s33
    %s37 = sphi 0, %s36
    %s53 = sphi 0, %s37
    %s57 = sphi 0, %s57
    %s59 = sphi 0, %s57
    %s60 = sphi 0, %s59
    %s74 = sphi 0, %s60
    %s78 = sphi 0, %s78
    %s80 = sphi 0, %s78
    %s81 = sphi 0, %s80
    %s95 = sphi 0, %s81
    %s103 = sphi 0, %s105
    %s106 = sphi 0, %s103
    %s107 = sphi 0, %s106
    %s123 = sphi 0, %s107
  $region4: #{transition_layer.3} parent=0 // loop_header_branch
    %12 = sbr.rel (%p10) target = $region8
  $region5: #{transition_layer.3} parent=0 // loop_body
    %s14 = ssub.s32 %s9, 1
    %s15 = ssub.s32 %s9, 2
    %s22 = sadd.s32 1, %s17
    %p23 = scmp.ge.s32.totalorder %s22, 1
    %s24 = scalar_select %p23, 0, %s22
    %s25 = sadd.s32 1, %s16
    %s26 = scalar_select %p23, %s25, %s16
    %p27 = scmp.ge.s32.totalorder %s26, 2
    %s28 = scalar_select %p27, 0, %s26
    %s29 = ssub.s32 %s16, %s28
    %s30 = ssub.s32 %s17, %s24
    %s31 = sor.u32 %s29, %s30
    %p32 = scmp.eq.s32.totalorder %s31, 0
    %s34 = sadd.s32 %s33, 1
    %s35 = scalar_select %p32, %s33, %s34
    %p38 = pneg %p32
    %p39 = scmp.eq.s32.totalorder %s9, 1
    %p40 = por %p38, %p39
    %p41 = scmp.ne.s32.totalorder %s33, %s36
    %p42 = scmp.eq.s32.totalorder %s9, 0
    %p43 = por %p41, %p42
    %p44 = scmp.ne.s32.totalorder %s33, %s36
    %p45 = scmp.eq.s32.totalorder %s14, 1
    %p46 = por %p44, %p45
    %p47 = scmp.ne.s32.totalorder %s36, %s37
    %p48 = scmp.eq.s32.totalorder %s14, 0
    %p49 = por %p47, %p48
    %p50 = scmp.ne.s32.totalorder %s36, %s37
    %p51 = scmp.eq.s32.totalorder %s15, 1
    %p52 = por %p50, %p51
    %p54 = scmp.ne.s32.totalorder %s37, %s53
    %p55 = scmp.eq.s32.totalorder %s15, 0
    %p56 = por %p54, %p55
    %s58 = sadd.s32 %s57, 1
    %p61 = scmp.eq.s32.totalorder %s9, 1
    %p62 = scmp.ne.s32.totalorder %s57, %s59
    %p63 = scmp.eq.s32.totalorder %s9, 0
    %p64 = por %p62, %p63
    %p65 = scmp.ne.s32.totalorder %s57, %s59
    %p66 = scmp.eq.s32.totalorder %s14, 1
    %p67 = por %p65, %p66
    %p68 = scmp.ne.s32.totalorder %s59, %s60
    %p69 = scmp.eq.s32.totalorder %s14, 0
    %p70 = por %p68, %p69
    %p71 = scmp.ne.s32.totalorder %s59, %s60
    %p72 = scmp.eq.s32.totalorder %s15, 1
    %p73 = por %p71, %p72
    %p75 = scmp.ne.s32.totalorder %s60, %s74
    %p76 = scmp.eq.s32.totalorder %s15, 0
    %p77 = por %p75, %p76
    %s79 = sadd.s32 %s78, 1
    %p82 = scmp.eq.s32.totalorder %s9, 1
    %p83 = scmp.ne.s32.totalorder %s78, %s80
    %p84 = scmp.eq.s32.totalorder %s9, 0
    %p85 = por %p83, %p84
    %p86 = scmp.ne.s32.totalorder %s78, %s80
    %p87 = scmp.eq.s32.totalorder %s14, 1
    %p88 = por %p86, %p87
    %p89 = scmp.ne.s32.totalorder %s80, %s81
    %p90 = scmp.eq.s32.totalorder %s14, 0
    %p91 = por %p89, %p90
    %p92 = scmp.ne.s32.totalorder %s80, %s81
    %p93 = scmp.eq.s32.totalorder %s15, 1
    %p94 = por %p92, %p93
    %p96 = scmp.ne.s32.totalorder %s81, %s95
    %p97 = scmp.eq.s32.totalorder %s15, 0
    %p98 = por %p96, %p97
    %s99 = ssub.s32 %s16, %s28
    %s100 = ssub.s32 %s17, %s24
    %s101 = sor.u32 %s99, %s100
    %p102 = scmp.eq.s32.totalorder %s101, 0
    %s104 = sadd.s32 %s103, 1
    %s105 = scalar_select %p102, %s103, %s104
    %p108 = pneg %p102
    %p109 = scmp.eq.s32.totalorder %s9, 1
    %p110 = por %p108, %p109
    %p111 = scmp.ne.s32.totalorder %s103, %s106
    %p112 = scmp.eq.s32.totalorder %s9, 0
    %p113 = por %p111, %p112
    %p114 = scmp.ne.s32.totalorder %s103, %s106
    %p115 = scmp.eq.s32.totalorder %s14, 1
    %p116 = por %p114, %p115
    %p117 = scmp.ne.s32.totalorder %s106, %s107
    %p118 = scmp.eq.s32.totalorder %s14, 0
    %p119 = por %p117, %p118
    %p120 = scmp.ne.s32.totalorder %s106, %s107
    %p121 = scmp.eq.s32.totalorder %s15, 1
    %p122 = por %p120, %p121
    %p124 = scmp.ne.s32.totalorder %s107, %s123
    %p125 = scmp.eq.s32.totalorder %s15, 0
    %p126 = por %p124, %p125
    %p127 = scmp.le.s32.totalorder 1, %s9
    %p128 = scmp.lt.s32.totalorder %s9, 3
    %p129 = pnand %p127, %p128
    %p130 = pneg %p129
    // Predicated region
    $region9: #{transition_layer.3} parent=5 // pred_check
      _
    $region10: #{transition_layer.3} parent=5 // pred_check_branch
      %132 = sbr.rel (%p129) target = $region12
    $region11: #{transition_layer.3} parent=5 // pred_region
      %s133 = ssub.s32 %s9, 1
      // Predicated region
      $region13: #{transition_layer.3} parent=11 // pred_check
        %p134 = pneg %p70
      $region14: #{transition_layer.3} parent=11 // pred_check_branch
        %136 = sbr.rel (%p134) target = $region16
      $region15: #{transition_layer.3} parent=11 // pred_region
        _
      $region16: #{transition_layer.3} parent=11 // pred_fallthru
        _
      // Predicated region
      $region17: #{transition_layer.3} parent=11 // pred_check
        %p137 = pneg %p91
      $region18: #{transition_layer.3} parent=11 // pred_check_branch
        %139 = sbr.rel (%p137) target = $region20
      $region19: #{transition_layer.3} parent=11 // pred_region
        _
      $region20: #{transition_layer.3} parent=11 // pred_fallthru
        _
    $region12: #{transition_layer.3} parent=5 // pred_fallthru
      _
    %p140 = scmp.lt.s32.totalorder %s9, 2
    // Predicated region
    $region21: #{transition_layer.3} parent=5 // pred_check
      %p141 = pneg %p140
    $region22: #{transition_layer.3} parent=5 // pred_check_branch
      %143 = sbr.rel (%p141) target = $region24
    $region23: #{transition_layer.3} parent=5 // pred_region
      // Predicated region
      $region25: #{transition_layer.3} parent=23 // pred_check
        %p144 = pneg %p43
      $region26: #{transition_layer.3} parent=23 // pred_check_branch
        %146 = sbr.rel (%p144) target = $region28
      $region27: #{transition_layer.3} parent=23 // pred_region
        %s147 = smul.u32 2, %s17
        %p148 = scmp.lt.s32.totalorder %s16, 1
        %s149 = scalar_select %p148, %s16, 1
        %p150 = scmp.lt.s32.totalorder %s147, 1
        %s151 = scalar_select %p150, %s147, 1
        %s152 = smul.addr %s149, 2
        %s153 = sadd.s32 %s151, %s152
        %s154 = smul.addr %s153, 8
        %s155 = scalar_lea.vmem %s0, %s154
        %s156 = smul.u32 2, %s17
      $region28: #{transition_layer.3} parent=23 // pred_fallthru
        _
    $region24: #{transition_layer.3} parent=5 // pred_fallthru
      _
    %p157 = scmp.le.s32.totalorder 1, %s9
    %p158 = scmp.lt.s32.totalorder %s9, 3
    %p159 = pnand %p157, %p158
    %p160 = pneg %p159
    // Predicated region
    $region29: #{transition_layer.3} parent=5 // pred_check
      _
    $region30: #{transition_layer.3} parent=5 // pred_check_branch
      %162 = sbr.rel (%p159) target = $region32
    $region31: #{transition_layer.3} parent=5 // pred_region
      %s163 = ssub.s32 %s9, 1
      %s164 = smul.u32 2, %s19
      %p165 = scmp.lt.s32.totalorder %s18, 1
      %s166 = scalar_select %p165, %s18, 1
      %p167 = scmp.lt.s32.totalorder %s164, 1
      %s168 = scalar_select %p167, %s164, 1
      %s169 = smul.addr %s166, 2
      %s170 = sadd.s32 %s168, %s169
      %s171 = smul.addr %s170, 8
      %s172 = scalar_lea.vmem %s0, %s171
      %p173 = pneg %p49
      %p174 = pneg %p46
      %p175 = pneg %p70
      %p176 = pneg %p67
      %p177 = pneg %p91
      %p178 = pneg %p88
      %p179 = pneg %p119
      %p180 = pneg %p116
      %s181 = smul.u32 2, %s19
      %p182 = scmp.lt.s32.totalorder %s18, 1
      %s183 = scalar_select %p182, %s18, 1
      %p184 = scmp.lt.s32.totalorder %s181, 1
      %s185 = scalar_select %p184, %s181, 1
      %s186 = smul.addr %s183, 2
      %s187 = sadd.s32 %s185, %s186
      %s188 = smul.addr %s187, 8
      %s189 = scalar_lea.vmem %s3, %s188
      %s190 = smul.u32 2, %s19
      %p191 = scmp.lt.s32.totalorder %s18, 1
      %s192 = scalar_select %p191, %s18, 1
      %p193 = scmp.lt.s32.totalorder %s190, 1
      %s194 = scalar_select %p193, %s190, 1
      %s195 = smul.addr %s192, 2
      %s196 = sadd.s32 %s194, %s195
      %s197 = smul.addr %s196, 8
      %s198 = scalar_lea.vmem %s0, %s197
      %s199 = smul.u32 2, %s19
      %s200 = smul.u32 2, %s19
      %p201 = scmp.lt.s32.totalorder %s18, 1
      %s202 = scalar_select %p201, %s18, 1
      %p203 = scmp.lt.s32.totalorder %s200, 1
      %s204 = scalar_select %p203, %s200, 1
      %s205 = smul.addr %s202, 2
      %s206 = sadd.s32 %s204, %s205
      %s207 = smul.addr %s206, 8
      %s208 = scalar_lea.vmem %s3, %s207
      %s209 = smul.u32 2, %s19
      %v210 = vld [vmem:[%s198] sm:$0xff]
      %v211 = vld [vmem:[%s198 + $0x8] sm:$0xff]
      %v212 = vld [vmem:[%s1] sm:$0xff]
      %214 = vset.pattern.permute.xlu0 0
      %215 = vperm.xlu0 %214, %v212
      %v216 = vpop.permute.xlu0 %215
      %v218 = vmul.f32 %v210, %v216
      %v219 = vmul.f32 %v211, %v216
      %v220 = vld [vmem:[%s2] sm:$0xff]
      %222 = vset.pattern.permute.xlu0 0
      %223 = vperm.xlu0 %222, %v220
      %v224 = vpop.permute.xlu0 %223
      %v226 = vadd.f32 %v218, %v224
      %v227 = vadd.f32 %v219, %v224
      %228 = vst [vmem:[%s208] sm:$0xff] %v226
      %229 = vst [vmem:[%s208 + $0x8] sm:$0xff] %v227
      %s230 = smul.u32 2, %s19
      %p231 = scmp.lt.s32.totalorder %s18, 1
      %s232 = scalar_select %p231, %s18, 1
      %p233 = scmp.lt.s32.totalorder %s230, 1
      %s234 = scalar_select %p233, %s230, 1
      %s235 = smul.addr %s232, 2
      %s236 = sadd.s32 %s234, %s235
      %s237 = smul.addr %s236, 8
      %s238 = scalar_lea.vmem %s3, %s237
      // Predicated region
      $region33: #{transition_layer.3} parent=31 // pred_check
        %p239 = pneg %p116
      $region34: #{transition_layer.3} parent=31 // pred_check_branch
        %241 = sbr.rel (%p239) target = $region36
      $region35: #{transition_layer.3} parent=31 // pred_region
        %s242 = smul.u32 2, %s19
      $region36: #{transition_layer.3} parent=31 // pred_fallthru
        _
    $region32: #{transition_layer.3} parent=5 // pred_fallthru
      _
    %p243 = scmp.le.s32.totalorder 2, %s9
    // Predicated region
    $region37: #{transition_layer.3} parent=5 // pred_check
      %p244 = pneg %p243
    $region38: #{transition_layer.3} parent=5 // pred_check_branch
      %246 = sbr.rel (%p244) target = $region40
    $region39: #{transition_layer.3} parent=5 // pred_region
      %s247 = ssub.s32 %s9, 2
      // Predicated region
      $region41: #{transition_layer.3} parent=39 // pred_check
        %p248 = pneg %p122
      $region42: #{transition_layer.3} parent=39 // pred_check_branch
        %250 = sbr.rel (%p248) target = $region44
      $region43: #{transition_layer.3} parent=39 // pred_region
        %s251 = smul.u32 2, %s21
        %p252 = scmp.lt.s32.totalorder %s20, 1
        %s253 = scalar_select %p252, %s20, 1
        %p254 = scmp.lt.s32.totalorder %s251, 1
        %s255 = scalar_select %p254, %s251, 1
        %s256 = smul.addr %s253, 2
        %s257 = sadd.s32 %s255, %s256
        %s258 = smul.addr %s257, 8
        %s259 = scalar_lea.vmem %s3, %s258
      $region44: #{transition_layer.3} parent=39 // pred_fallthru
        _
    $region40: #{transition_layer.3} parent=5 // pred_fallthru
      _
  $region6: #{transition_layer.3} parent=0 // loop_footer
    %s13 = sadd.s32 1, %s9
  $region7: #{transition_layer.3} parent=0 // loop_footer_branch
    %8 = sbr.rel target = $region3
  $region8: #{transition_layer.3} parent=0 // loop_exit
    _

// kernel: transition_layer.2
$region0: #{transition_layer.2}
  #allocation0 [shape = 'u32[]', space=smem, size = 0x4, offset = 0x4, fixed_abs, tag = 'smem constant byte address 0x4 - core index']
  #allocation1 [shape = 'u32[72,128]{1,0:T(1,128)}', space=vmem, size = 0x9000, scoped, tag = 'internal scratch']
  %s0 = inlined_call_operand.vmem [shape: f32[2,4,256], index: 0, kind: input, shape index: {}]
  %s1 = inlined_call_operand.vmem [shape: f32[8,4], index: 1, kind: input, shape index: {}]
  %s2 = inlined_call_operand.vmem [shape: f32[2,8,256], index: 2, kind: output, shape index: {0}]
  %s3 = inlined_call_operand.vmem [shape: f32[2,8,1], index: 3, kind: output, shape index: {1}]
  %s4 = inlined_call_operand.vmem [shape: f32[2,8,1], index: 4, kind: output, shape index: {2}]
  %5 = xla_tuple %s2, %s3, %s4
  %s6 = sld [smem:[#allocation0]]
  $region61: #{transition_layer.2} parent=0
    _
  %s8 = ssub.s32 1, %s6
  %s9 = scalar_select 0, %s8, %s6
  loop: start=0, step=1, limit=4
  $region2: #{transition_layer.2} parent=0 // loop_pre_header
    _
  $region3: #{transition_layer.2} parent=0 // loop_header
    %s11 = sphi 0, %s15
    %p12 = scmp.ge.s32.totalorder %s11, 4
    %s18 = sphi 0, %s30
    %s19 = sphi 0, %s26
    %s20 = sphi 0, %s18
    %s21 = sphi 0, %s19
    %s22 = sphi 0, %s20
    %s23 = sphi 0, %s21
    %s35 = sphi 0, %s37
    %s38 = sphi 0, %s35
    %s39 = sphi 0, %s38
    %s55 = sphi 0, %s39
    %s59 = sphi 0, %s59
    %s61 = sphi 0, %s59
    %s62 = sphi 0, %s61
    %s76 = sphi 0, %s62
    %s84 = sphi 0, %s86
    %s87 = sphi 0, %s84
    %s88 = sphi 0, %s87
    %s104 = sphi 0, %s88
    %s110 = sphi 0, %s112
    %s113 = sphi 0, %s110
    %s114 = sphi 0, %s113
    %s130 = sphi 0, %s114
    %s136 = sphi 0, %s138
    %s139 = sphi 0, %s136
    %s140 = sphi 0, %s139
    %s156 = sphi 0, %s140
  $region4: #{transition_layer.2} parent=0 // loop_header_branch
    %14 = sbr.rel (%p12) target = $region8
  $region5: #{transition_layer.2} parent=0 // loop_body
    %s16 = ssub.s32 %s11, 1
    %s17 = ssub.s32 %s11, 2
    %s24 = sadd.s32 1, %s19
    %p25 = scmp.ge.s32.totalorder %s24, 1
    %s26 = scalar_select %p25, 0, %s24
    %s27 = sadd.s32 1, %s18
    %s28 = scalar_select %p25, %s27, %s18
    %p29 = scmp.ge.s32.totalorder %s28, 2
    %s30 = scalar_select %p29, 0, %s28
    %s31 = ssub.s32 %s18, %s30
    %s32 = ssub.s32 %s19, %s26
    %s33 = sor.u32 %s31, %s32
    %p34 = scmp.eq.s32.totalorder %s33, 0
    %s36 = sadd.s32 %s35, 1
    %s37 = scalar_select %p34, %s35, %s36
    %p40 = pneg %p34
    %p41 = scmp.eq.s32.totalorder %s11, 1
    %p42 = por %p40, %p41
    %p43 = scmp.ne.s32.totalorder %s35, %s38
    %p44 = scmp.eq.s32.totalorder %s11, 0
    %p45 = por %p43, %p44
    %p46 = scmp.ne.s32.totalorder %s35, %s38
    %p47 = scmp.eq.s32.totalorder %s16, 1
    %p48 = por %p46, %p47
    %p49 = scmp.ne.s32.totalorder %s38, %s39
    %p50 = scmp.eq.s32.totalorder %s16, 0
    %p51 = por %p49, %p50
    %p52 = scmp.ne.s32.totalorder %s38, %s39
    %p53 = scmp.eq.s32.totalorder %s17, 1
    %p54 = por %p52, %p53
    %p56 = scmp.ne.s32.totalorder %s39, %s55
    %p57 = scmp.eq.s32.totalorder %s17, 0
    %p58 = por %p56, %p57
    %s60 = sadd.s32 %s59, 1
    %p63 = scmp.eq.s32.totalorder %s11, 1
    %p64 = scmp.ne.s32.totalorder %s59, %s61
    %p65 = scmp.eq.s32.totalorder %s11, 0
    %p66 = por %p64, %p65
    %p67 = scmp.ne.s32.totalorder %s59, %s61
    %p68 = scmp.eq.s32.totalorder %s16, 1
    %p69 = por %p67, %p68
    %p70 = scmp.ne.s32.totalorder %s61, %s62
    %p71 = scmp.eq.s32.totalorder %s16, 0
    %p72 = por %p70, %p71
    %p73 = scmp.ne.s32.totalorder %s61, %s62
    %p74 = scmp.eq.s32.totalorder %s17, 1
    %p75 = por %p73, %p74
    %p77 = scmp.ne.s32.totalorder %s62, %s76
    %p78 = scmp.eq.s32.totalorder %s17, 0
    %p79 = por %p77, %p78
    %s80 = ssub.s32 %s18, %s30
    %s81 = ssub.s32 %s19, %s26
    %s82 = sor.u32 %s80, %s81
    %p83 = scmp.eq.s32.totalorder %s82, 0
    %s85 = sadd.s32 %s84, 1
    %s86 = scalar_select %p83, %s84, %s85
    %p89 = pneg %p83
    %p90 = scmp.eq.s32.totalorder %s11, 1
    %p91 = por %p89, %p90
    %p92 = scmp.ne.s32.totalorder %s84, %s87
    %p93 = scmp.eq.s32.totalorder %s11, 0
    %p94 = por %p92, %p93
    %p95 = scmp.ne.s32.totalorder %s84, %s87
    %p96 = scmp.eq.s32.totalorder %s16, 1
    %p97 = por %p95, %p96
    %p98 = scmp.ne.s32.totalorder %s87, %s88
    %p99 = scmp.eq.s32.totalorder %s16, 0
    %p100 = por %p98, %p99
    %p101 = scmp.ne.s32.totalorder %s87, %s88
    %p102 = scmp.eq.s32.totalorder %s17, 1
    %p103 = por %p101, %p102
    %p105 = scmp.ne.s32.totalorder %s88, %s104
    %p106 = scmp.eq.s32.totalorder %s17, 0
    %p107 = por %p105, %p106
    %s108 = ssub.s32 %s18, %s30
    %p109 = scmp.eq.s32.totalorder %s108, 0
    %s111 = sadd.s32 %s110, 1
    %s112 = scalar_select %p109, %s110, %s111
    %p115 = pneg %p109
    %p116 = scmp.eq.s32.totalorder %s11, 1
    %p117 = por %p115, %p116
    %p118 = scmp.ne.s32.totalorder %s110, %s113
    %p119 = scmp.eq.s32.totalorder %s11, 0
    %p120 = por %p118, %p119
    %p121 = scmp.ne.s32.totalorder %s110, %s113
    %p122 = scmp.eq.s32.totalorder %s16, 1
    %p123 = por %p121, %p122
    %p124 = scmp.ne.s32.totalorder %s113, %s114
    %p125 = scmp.eq.s32.totalorder %s16, 0
    %p126 = por %p124, %p125
    %p127 = scmp.ne.s32.totalorder %s113, %s114
    %p128 = scmp.eq.s32.totalorder %s17, 1
    %p129 = por %p127, %p128
    %p131 = scmp.ne.s32.totalorder %s114, %s130
    %p132 = scmp.eq.s32.totalorder %s17, 0
    %p133 = por %p131, %p132
    %s134 = ssub.s32 %s18, %s30
    %p135 = scmp.eq.s32.totalorder %s134, 0
    %s137 = sadd.s32 %s136, 1
    %s138 = scalar_select %p135, %s136, %s137
    %p141 = pneg %p135
    %p142 = scmp.eq.s32.totalorder %s11, 1
    %p143 = por %p141, %p142
    %p144 = scmp.ne.s32.totalorder %s136, %s139
    %p145 = scmp.eq.s32.totalorder %s11, 0
    %p146 = por %p144, %p145
    %p147 = scmp.ne.s32.totalorder %s136, %s139
    %p148 = scmp.eq.s32.totalorder %s16, 1
    %p149 = por %p147, %p148
    %p150 = scmp.ne.s32.totalorder %s139, %s140
    %p151 = scmp.eq.s32.totalorder %s16, 0
    %p152 = por %p150, %p151
    %p153 = scmp.ne.s32.totalorder %s139, %s140
    %p154 = scmp.eq.s32.totalorder %s17, 1
    %p155 = por %p153, %p154
    %p157 = scmp.ne.s32.totalorder %s140, %s156
    %p158 = scmp.eq.s32.totalorder %s17, 0
    %p159 = por %p157, %p158
    %p160 = scmp.le.s32.totalorder 1, %s11
    %p161 = scmp.lt.s32.totalorder %s11, 3
    %p162 = pnand %p160, %p161
    %p163 = pneg %p162
    // Predicated region
    $region9: #{transition_layer.2} parent=5 // pred_check
      _
    $region10: #{transition_layer.2} parent=5 // pred_check_branch
      %165 = sbr.rel (%p162) target = $region12
    $region11: #{transition_layer.2} parent=5 // pred_region
      %s166 = ssub.s32 %s11, 1
      // Predicated region
      $region13: #{transition_layer.2} parent=11 // pred_check
        %p167 = pneg %p72
      $region14: #{transition_layer.2} parent=11 // pred_check_branch
        %169 = sbr.rel (%p167) target = $region16
      $region15: #{transition_layer.2} parent=11 // pred_region
        _
      $region16: #{transition_layer.2} parent=11 // pred_fallthru
        _
    $region12: #{transition_layer.2} parent=5 // pred_fallthru
      _
    %p170 = scmp.lt.s32.totalorder %s11, 2
    // Predicated region
    $region17: #{transition_layer.2} parent=5 // pred_check
      %p171 = pneg %p170
    $region18: #{transition_layer.2} parent=5 // pred_check_branch
      %173 = sbr.rel (%p171) target = $region20
    $region19: #{transition_layer.2} parent=5 // pred_region
      // Predicated region
      $region21: #{transition_layer.2} parent=19 // pred_check
        %p174 = pneg %p45
      $region22: #{transition_layer.2} parent=19 // pred_check_branch
        %176 = sbr.rel (%p174) target = $region24
      $region23: #{transition_layer.2} parent=19 // pred_region
        %s177 = smul.u32 2, %s19
        %p178 = scmp.lt.s32.totalorder %s18, 1
        %s179 = scalar_select %p178, %s18, 1
        %p180 = scmp.lt.s32.totalorder %s177, 1
        %s181 = scalar_select %p180, %s177, 1
        %s182 = smul.addr %s179, 2
        %s183 = sadd.s32 %s181, %s182
        %s184 = smul.addr %s183, 4
        %s185 = scalar_lea.vmem %s0, %s184
        %s186 = smul.u32 2, %s19
      $region24: #{transition_layer.2} parent=19 // pred_fallthru
        _
    $region20: #{transition_layer.2} parent=5 // pred_fallthru
      _
    %p187 = scmp.le.s32.totalorder 1, %s11
    %p188 = scmp.lt.s32.totalorder %s11, 3
    %p189 = pnand %p187, %p188
    %p190 = pneg %p189
    // Predicated region
    $region25: #{transition_layer.2} parent=5 // pred_check
      _
    $region26: #{transition_layer.2} parent=5 // pred_check_branch
      %192 = sbr.rel (%p189) target = $region28
    $region27: #{transition_layer.2} parent=5 // pred_region
      %s193 = ssub.s32 %s11, 1
      %s194 = smul.u32 2, %s21
      %p195 = scmp.lt.s32.totalorder %s20, 1
      %s196 = scalar_select %p195, %s20, 1
      %p197 = scmp.lt.s32.totalorder %s194, 1
      %s198 = scalar_select %p197, %s194, 1
      %s199 = smul.addr %s196, 2
      %s200 = sadd.s32 %s198, %s199
      %s201 = smul.addr %s200, 4
      %s202 = scalar_lea.vmem %s0, %s201
      %p203 = pneg %p51
      %p204 = pneg %p48
      %p205 = pneg %p72
      %p206 = pneg %p69
      %p207 = pneg %p100
      %p208 = pneg %p97
      %s209 = smul.u32 2, %s21
      %p210 = scmp.lt.s32.totalorder %s20, 1
      %s211 = scalar_select %p210, %s20, 1
      %p212 = scmp.lt.s32.totalorder %s209, 1
      %s213 = scalar_select %p212, %s209, 1
      %s214 = smul.addr %s211, 2
      %s215 = sadd.s32 %s213, %s214
      %s216 = smul.addr %s215, 8
      %s217 = scalar_lea.vmem %s2, %s216
      %p218 = pneg %p126
      %p219 = pneg %p123
      %p220 = scmp.lt.s32.totalorder %s20, 1
      %s221 = scalar_select %p220, %s20, 1
      %s222 = smul.addr %s221, 8
      %s223 = scalar_lea.vmem %s3, %s222
      %p224 = pneg %p152
      %p225 = pneg %p149
      %p226 = scmp.lt.s32.totalorder %s20, 1
      %s227 = scalar_select %p226, %s20, 1
      %s228 = smul.addr %s227, 8
      %s229 = scalar_lea.vmem %s4, %s228
      %s230 = smul.u32 2, %s21
      %p231 = scmp.lt.s32.totalorder %s20, 1
      %s232 = scalar_select %p231, %s20, 1
      %p233 = scmp.lt.s32.totalorder %s230, 1
      %s234 = scalar_select %p233, %s230, 1
      %s235 = smul.addr %s232, 2
      %s236 = sadd.s32 %s234, %s235
      %s237 = smul.addr %s236, 4
      %s238 = scalar_lea.vmem %s0, %s237
      %s239 = smul.u32 2, %s21
      %s240 = smul.u32 2, %s21
      %p241 = scmp.lt.s32.totalorder %s20, 1
      %s242 = scalar_select %p241, %s20, 1
      %p243 = scmp.lt.s32.totalorder %s240, 1
      %s244 = scalar_select %p243, %s240, 1
      %s245 = smul.addr %s242, 2
      %s246 = sadd.s32 %s244, %s245
      %s247 = smul.addr %s246, 8
      %s248 = scalar_lea.vmem %s2, %s247
      %s249 = smul.u32 2, %s21
      %p250 = scmp.lt.s32.totalorder %s20, 1
      %s251 = scalar_select %p250, %s20, 1
      %s252 = smul.addr %s251, 8
      %s253 = scalar_lea.vmem %s3, %s252
      %p254 = scmp.lt.s32.totalorder %s20, 1
      %s255 = scalar_select %p254, %s20, 1
      %s256 = smul.addr %s255, 8
      %s257 = scalar_lea.vmem %s4, %s256
      %v258 = vld [vmem:[%s238] sm:$0xff]
      %v259 = vld [vmem:[%s1] sm:$0xff]
      %261 = vst [vmem:[#allocation1] ss:$2 sm:$0xff] %v258
      %v262 = vld.sshfl [vmem:[#allocation1] sm:$0xff pattern:$0x75316420]
      %v263 = vld.sshfl [vmem:[#allocation1 + $0x8] sm:$0xff pattern:$0x75316420]
      %vm264 = vcmask 31744
      %v266 = vsel %vm264, %v259, 0
      %vm268 = vcmask 1043456
      %v269 = vsel %vm268, %v262, 0
      %v271 = vsel %vm268, %v263, 0
      %273 = vmatpush.msra.mxu0 0.0
      %274 = vmatpush.msra.mxu0 0.0
      %275 = vmatpush.msra.mxu0 0.0
      %276 = vmatpush.msra.mxu0 0.0
      %277 = vmatpush.msra.mxu0 0.0
      %278 = vmatpush.msra.mxu0 0.0
      %279 = vmatpush.msra.mxu0 0.0
      %280 = vmatpush.msra.mxu0 0.0
      %281 = vmatpush.msra.mxu0 0.0
      %282 = vmatpush.msra.mxu0 0.0
      %283 = vmatpush.msra.mxu0 0.0
      %284 = vmatpush.msra.mxu0 0.0
      %285 = vmatpush.msra.mxu0 0.0
      %286 = vmatpush.msra.mxu0 0.0
      %287 = vmatpush.msra.mxu0 0.0
      %288 = vmatpush.msra.mxu0 %v269
      %289 = vmatmul.f32.gmra.mxu0 %v266
      %v290 = vpop.f32.mrf.mxu0
      %v291 = vadd.f32 0.0, %v290
      %292 = vdwg.mxu0
      %293 = vmatpush.msra.mxu0 0.0
      %294 = vmatpush.msra.mxu0 0.0
      %295 = vmatpush.msra.mxu0 0.0
      %296 = vmatpush.msra.mxu0 0.0
      %297 = vmatpush.msra.mxu0 0.0
      %298 = vmatpush.msra.mxu0 0.0
      %299 = vmatpush.msra.mxu0 0.0
      %300 = vmatpush.msra.mxu0 0.0
      %301 = vmatpush.msra.mxu0 0.0
      %302 = vmatpush.msra.mxu0 0.0
      %303 = vmatpush.msra.mxu0 0.0
      %304 = vmatpush.msra.mxu0 0.0
      %305 = vmatpush.msra.mxu0 0.0
      %306 = vmatpush.msra.mxu0 0.0
      %307 = vmatpush.msra.mxu0 0.0
      %308 = vmatpush.msra.mxu0 %v271
      %309 = vmatmul.f32.gmra.mxu0 %v266
      %v310 = vpop.f32.mrf.mxu0
      %v311 = vadd.f32 0.0, %v310
      %312 = vdwg.mxu0
      %v313 = vmax.f32 %v291, 0.0
      %v314 = vmax.f32 %v311, 0.0
      %315 = vst [vmem:[%s248] sm:$0xff] %v313
      %316 = vst [vmem:[%s248 + $0x8] sm:$0xff] %v314
      %p317 = scmp.eq.s32.totalorder %s21, 0
      // Predicated region
      $region29: #{transition_layer.2} parent=27 // pred_check
        %p318 = pneg %p317
      $region30: #{transition_layer.2} parent=27 // pred_check_branch
        %320 = sbr.rel (%p318) target = $region32
      $region31: #{transition_layer.2} parent=27 // pred_region
        %vm321 = vcmask 7168
        %322 = vst.msk [vmem:[%s253] sm:$0xff] %vm321, 0.0
        %323 = vst.msk [vmem:[%s257] sm:$0xff] %vm321, 0.0
      $region32: #{transition_layer.2} parent=27 // pred_fallthru
        _
      %v324 = vld [vmem:[%s253] sm:$0xff]
      %v325 = vadd.f32 %v313, %v314
      %326 = vadd.xlane.f32.xlu0 %v325
      %v327 = vpop.xlane.xlu0 %326
      %v328 = vadd.f32 %v324, %v327
      %vm329 = vcmask 7168
      %330 = vst.msk [vmem:[%s253] sm:$0xff] %vm329, %v328
      %v331 = vld [vmem:[%s257] sm:$0xff]
      %v332 = vmul.f32 %v313, %v313
      %v333 = vmul.f32 %v314, %v314
      %v334 = vadd.f32 %v332, %v333
      %335 = vadd.xlane.f32.xlu0 %v334
      %v336 = vpop.xlane.xlu0 %335
      %v337 = vadd.f32 %v331, %v336
      %338 = vst.msk [vmem:[%s257] sm:$0xff] %vm329, %v337
      %s339 = smul.u32 2, %s21
      %p340 = scmp.lt.s32.totalorder %s20, 1
      %s341 = scalar_select %p340, %s20, 1
      %p342 = scmp.lt.s32.totalorder %s339, 1
      %s343 = scalar_select %p342, %s339, 1
      %s344 = smul.addr %s341, 2
      %s345 = sadd.s32 %s343, %s344
      %s346 = smul.addr %s345, 8
      %s347 = scalar_lea.vmem %s2, %s346
      %p348 = scmp.lt.s32.totalorder %s20, 1
      %s349 = scalar_select %p348, %s20, 1
      %s350 = smul.addr %s349, 8
      %s351 = scalar_lea.vmem %s3, %s350
      %p352 = scmp.lt.s32.totalorder %s20, 1
      %s353 = scalar_select %p352, %s20, 1
      %s354 = smul.addr %s353, 8
      %s355 = scalar_lea.vmem %s4, %s354
      // Predicated region
      $region33: #{transition_layer.2} parent=27 // pred_check
        %p356 = pneg %p97
      $region34: #{transition_layer.2} parent=27 // pred_check_branch
        %358 = sbr.rel (%p356) target = $region36
      $region35: #{transition_layer.2} parent=27 // pred_region
        %s359 = smul.u32 2, %s21
      $region36: #{transition_layer.2} parent=27 // pred_fallthru
        _
      // Predicated region
      $region37: #{transition_layer.2} parent=27 // pred_check
        %p360 = pneg %p123
      $region38: #{transition_layer.2} parent=27 // pred_check_branch
        %362 = sbr.rel (%p360) target = $region40
      $region39: #{transition_layer.2} parent=27 // pred_region
        _
      $region40: #{transition_layer.2} parent=27 // pred_fallthru
        _
      // Predicated region
      $region41: #{transition_layer.2} parent=27 // pred_check
        %p363 = pneg %p149
      $region42: #{transition_layer.2} parent=27 // pred_check_branch
        %365 = sbr.rel (%p363) target = $region44
      $region43: #{transition_layer.2} parent=27 // pred_region
        _
      $region44: #{transition_layer.2} parent=27 // pred_fallthru
        _
    $region28: #{transition_layer.2} parent=5 // pred_fallthru
      _
    %p366 = scmp.le.s32.totalorder 2, %s11
    // Predicated region
    $region45: #{transition_layer.2} parent=5 // pred_check
      %p367 = pneg %p366
    $region46: #{transition_layer.2} parent=5 // pred_check_branch
      %369 = sbr.rel (%p367) target = $region48
    $region47: #{transition_layer.2} parent=5 // pred_region
      %s370 = ssub.s32 %s11, 2
      // Predicated region
      $region49: #{transition_layer.2} parent=47 // pred_check
        %p371 = pneg %p103
      $region50: #{transition_layer.2} parent=47 // pred_check_branch
        %373 = sbr.rel (%p371) target = $region52
      $region51: #{transition_layer.2} parent=47 // pred_region
        %s374 = smul.u32 2, %s23
        %p375 = scmp.lt.s32.totalorder %s22, 1
        %s376 = scalar_select %p375, %s22, 1
        %p377 = scmp.lt.s32.totalorder %s374, 1
        %s378 = scalar_select %p377, %s374, 1
        %s379 = smul.addr %s376, 2
        %s380 = sadd.s32 %s378, %s379
        %s381 = smul.addr %s380, 8
        %s382 = scalar_lea.vmem %s2, %s381
      $region52: #{transition_layer.2} parent=47 // pred_fallthru
        _
      // Predicated region
      $region53: #{transition_layer.2} parent=47 // pred_check
        %p383 = pneg %p129
      $region54: #{transition_layer.2} parent=47 // pred_check_branch
        %385 = sbr.rel (%p383) target = $region56
      $region55: #{transition_layer.2} parent=47 // pred_region
        %p386 = scmp.lt.s32.totalorder %s22, 1
        %s387 = scalar_select %p386, %s22, 1
        %s388 = smul.addr %s387, 8
        %s389 = scalar_lea.vmem %s3, %s388
      $region56: #{transition_layer.2} parent=47 // pred_fallthru
        _
      // Predicated region
      $region57: #{transition_layer.2} parent=47 // pred_check
        %p390 = pneg %p155
      $region58: #{transition_layer.2} parent=47 // pred_check_branch
        %392 = sbr.rel (%p390) target = $region60
      $region59: #{transition_layer.2} parent=47 // pred_region
        %p393 = scmp.lt.s32.totalorder %s22, 1
        %s394 = scalar_select %p393, %s22, 1
        %s395 = smul.addr %s394, 8
        %s396 = scalar_lea.vmem %s4, %s395
      $region60: #{transition_layer.2} parent=47 // pred_fallthru
        _
    $region48: #{transition_layer.2} parent=5 // pred_fallthru
      _
  $region6: #{transition_layer.2} parent=0 // loop_footer
    %s15 = sadd.s32 1, %s11
  $region7: #{transition_layer.2} parent=0 // loop_footer_branch
    %10 = sbr.rel target = $region3
  $region8: #{transition_layer.2} parent=0 // loop_exit
    _

</llo_original>
